<compile_context>
chip_gen: v6e
topology: v6e:2x2x1
jax: 0.10.0
libtpu: 0.0.40
codegen_flags: <defaults>
</compile_context>

<pallas_src>
import functools

import jax
import jax.numpy as jnp
from jax.experimental import pallas as pl
from jax.experimental.pallas import tpu as pltpu


def _vae_loss_kernel(p_ref, y_ref, mu_ref, lv_ref, o_ref, bce_acc, sq_acc,
                     *, total, needs_mask, w_bce, w_mse, w_kld):
    i = pl.program_id(0)
    nsteps = pl.num_programs(0)

    @pl.when(i == 0)
    def _init():
        bce_acc[...] = jnp.zeros_like(bce_acc)
        sq_acc[...] = jnp.zeros_like(sq_acc)

    p = p_ref[...].astype(jnp.float32)
    y = y_ref[...].astype(jnp.float32)
    tile_r, lanes = p.shape

    # BCE (torch semantics: log clamped at -100) and squared error, per element.
    logp = jnp.maximum(jnp.log(p), -100.0)
    log1mp = jnp.maximum(jnp.log(1.0 - p), -100.0)
    bce_e = -(y * logp + (1.0 - y) * log1mp)
    d = p - y
    sq_e = d * d

    if needs_mask:
        # Only needed when the flat size is not a multiple of 1024 or the last block
        # is partial: mask out pad / out-of-bounds elements by flat index.
        row = jax.lax.broadcasted_iota(jnp.int32, (tile_r, lanes), 0)
        lane = jax.lax.broadcasted_iota(jnp.int32, (tile_r, lanes), 1)
        flat = (i * tile_r + row) * lanes + lane
        mask = flat < total
        bce_e = jnp.where(mask, bce_e, 0.0)
        sq_e = jnp.where(mask, sq_e, 0.0)

    # Fold the (tile_r, 128) block into the resident (8, 128) vreg accumulators.
    # Leading-axis sum = pure VPU adds; no cross-lane reduce in the steady state.
    bce_acc[...] += bce_e.reshape(tile_r // 8, 8, lanes).sum(axis=0)
    sq_acc[...] += sq_e.reshape(tile_r // 8, 8, lanes).sum(axis=0)

    @pl.when(i == nsteps - 1)
    def _finalize():
        bce_total = jnp.sum(bce_acc[...])
        mse = jnp.sum(sq_acc[...]) * jnp.float32(1.0 / total)
        mu = mu_ref[...].astype(jnp.float32)
        lv = lv_ref[...].astype(jnp.float32)
        kld = -0.5 * jnp.sum(1.0 + lv - mu * mu - jnp.exp(lv))
        o_ref[0, 0] = w_bce * bce_total + w_mse * mse + w_kld * kld


def vae_loss_bce_mse(raw_predictions, labels_tensor, mu, logvar,
                     weights=(1.0, 1.0, 1.0)):
    assert raw_predictions.shape == labels_tensor.shape
    assert mu.shape == logvar.shape

    LANES = 128
    SUB = 8
    MIN_CHUNK = SUB * LANES  # 1024 elements = one (8,128) f32 tile

    p = raw_predictions.reshape(-1)
    y = labels_tensor.reshape(-1)
    total = p.shape[0]

    padded_total = ((total + MIN_CHUNK - 1) // MIN_CHUNK) * MIN_CHUNK
    if padded_total != total:
        # Rare ragged-shape path only (<1024 extra elements). Pad values are fully
        # masked in-kernel, so they never affect the loss.
        pad = padded_total - total
        p = jnp.pad(p, (0, pad), constant_values=0.5)
        y = jnp.pad(y, (0, pad), constant_values=0.5)

    rows = padded_total // LANES            # multiple of 8
    p2 = p.reshape(rows, LANES)             # layout-free reshape, no extra HBM pass
    y2 = y.reshape(rows, LANES)

    # Latents are tiny; keep them as single resident full blocks.
    mu2 = mu.reshape(1, -1)
    lv2 = logvar.reshape(1, -1)

    # Large blocks: up to 2048 rows x 128 lanes (1 MiB f32 per input per block).
    TILE_R = min(2048, rows)                # rows is a multiple of 8, so TILE_R is too
    nsteps = pl.cdiv(rows, TILE_R)
    needs_mask = (padded_total != total) or (rows % TILE_R != 0)

    kernel = functools.partial(
        _vae_loss_kernel,
        total=total,
        needs_mask=needs_mask,
        w_bce=float(weights[0]),
        w_mse=float(weights[1]),
        w_kld=float(weights[2]),
    )

    out = pl.pallas_call(
        kernel,
        out_shape=jax.ShapeDtypeStruct((1, 1), jnp.float32),
        grid_spec=pltpu.PrefetchScalarGridSpec(
            num_scalar_prefetch=0,
            grid=(nsteps,),
            in_specs=[
                pl.BlockSpec((TILE_R, LANES), lambda i: (i, 0)),
                pl.BlockSpec((TILE_R, LANES), lambda i: (i, 0)),
                pl.BlockSpec(mu2.shape, lambda i: (0, 0)),   # resident full block
                pl.BlockSpec(lv2.shape, lambda i: (0, 0)),   # resident full block
            ],
            # Scalar loss lives in SMEM; written once at the last grid step.
            out_specs=pl.BlockSpec(memory_space=pltpu.MemorySpace.SMEM),
            scratch_shapes=[
                pltpu.VMEM((SUB, LANES), jnp.float32),   # BCE partial sums
                pltpu.VMEM((SUB, LANES), jnp.float32),   # squared-error partial sums
            ],
        ),
        compiler_params=pltpu.CompilerParams(
            dimension_semantics=("arbitrary",),   # sequential reduction axis
        ),
    )(p2, y2, mu2, lv2)

    return out[0, 0]


def _reference(raw_predictions, labels_tensor, mu, logvar, weights):
    p = raw_predictions.astype(jnp.float32)
    y = labels_tensor.astype(jnp.float32)
    logp = jnp.maximum(jnp.log(p), -100.0)
    log1mp = jnp.maximum(jnp.log(1.0 - p), -100.0)
    bce = -jnp.sum(y * logp + (1.0 - y) * log1mp)
    mse = jnp.mean((p - y) ** 2)
    kld = -0.5 * jnp.sum(1.0 + logvar - mu * mu - jnp.exp(logvar))
    return weights[0] * bce + weights[1] * mse + weights[2] * kld


if __name__ == "__main__":
    key = jax.random.PRNGKey(0)
    k1, k2, k3, k4 = jax.random.split(key, 4)

    # Small shapes consistent with the module: per-pixel predictions/labels (NCHW)
    # in [0, 1] (BCELoss requires probabilities), plus a small VAE latent.
    shape = (2, 4, 16, 16)
    latent = (2, 32)
    raw_predictions = jax.nn.sigmoid(jax.random.normal(k1, shape, dtype=jnp.float32))
    labels_tensor = jax.random.uniform(k2, shape, dtype=jnp.float32)
    mu = 0.5 * jax.random.normal(k3, latent, dtype=jnp.float32)
    logvar = 0.5 * jax.random.normal(k4, latent, dtype=jnp.float32)

    out = vae_loss_bce_mse(raw_predictions, labels_tensor, mu, logvar,
                           weights=(1.0, 1.0, 1.0))
    out = jax.block_until_ready(out)

    ref = _reference(raw_predictions, labels_tensor, mu, logvar, (1.0, 1.0, 1.0))
    assert jnp.allclose(out, ref, rtol=1e-4, atol=1e-2), (out, ref)
    print("KERNEL_OK")
</pallas_src>

<mosaic_0001>
module attributes {stable_mosaic.version = 11 : i64} {
  func.func @_vae_loss_kernel(%arg0: i32, %arg1: memref<16x128xf32, #tpu.memory_space<vmem>>, %arg2: memref<16x128xf32, #tpu.memory_space<vmem>>, %arg3: memref<1x64xf32, #tpu.memory_space<vmem>>, %arg4: memref<1x64xf32, #tpu.memory_space<vmem>>, %arg5: memref<1x1xf32, #tpu.memory_space<smem>>, %arg6: memref<8x128xf32, #tpu.memory_space<vmem>>, %arg7: memref<8x128xf32, #tpu.memory_space<vmem>>) attributes {dimension_semantics = [#tpu.dimension_semantics<arbitrary>], iteration_bounds = array<i64: 1>, scalar_prefetch = 0 : i64, scratch_operands = 2 : i64, tpu.core_type = #tpu.core_type<tc>, window_params = [{transform_indices = @transform_0, window_bounds = array<i64: 16, 128>}, {transform_indices = @transform_1, window_bounds = array<i64: 16, 128>}, {pipeline_mode = #tpu.pipeline_mode<synchronous>, transform_indices = @transform_2, window_bounds = array<i64: 1, 64>}, {pipeline_mode = #tpu.pipeline_mode<synchronous>, transform_indices = @transform_3, window_bounds = array<i64: 1, 64>}, {transform_indices = @transform_4, window_bounds = array<i64: 1, 1>}]} {
    %c0_i32 = arith.constant 0 : i32
    %0 = arith.cmpi eq, %arg0, %c0_i32 : i32
    %1 = arith.extui %0 : i1 to i32
    %c0_i32_0 = arith.constant 0 : i32
    %2 = arith.cmpi ne, %1, %c0_i32_0 : i32
    scf.if %2 {
      %cst_20 = arith.constant 0.000000e+00 : f32
      %35 = vector.broadcast %cst_20 : f32 to vector<8x128xf32>
      %c0_21 = arith.constant 0 : index
      %c0_22 = arith.constant 0 : index
      %36 = vector.load %arg6[%c0_21, %c0_22] : memref<8x128xf32, #tpu.memory_space<vmem>>, vector<8x128xf32>
      tpu.vector_store %arg6[%c0_21, %c0_22], %35 {strides = array<i32>} : memref<8x128xf32, #tpu.memory_space<vmem>>, vector<8x128xf32>,
      %cst_23 = arith.constant 0.000000e+00 : f32
      %37 = vector.broadcast %cst_23 : f32 to vector<8x128xf32>
      %c0_24 = arith.constant 0 : index
      %c0_25 = arith.constant 0 : index
      %38 = vector.load %arg7[%c0_24, %c0_25] : memref<8x128xf32, #tpu.memory_space<vmem>>, vector<8x128xf32>
      tpu.vector_store %arg7[%c0_24, %c0_25], %37 {strides = array<i32>} : memref<8x128xf32, #tpu.memory_space<vmem>>, vector<8x128xf32>,
    } else {
    }
    %c0 = arith.constant 0 : index
    %c0_1 = arith.constant 0 : index
    %3 = vector.load %arg1[%c0, %c0_1] : memref<16x128xf32, #tpu.memory_space<vmem>>, vector<16x128xf32>
    %c0_2 = arith.constant 0 : index
    %c0_3 = arith.constant 0 : index
    %4 = vector.load %arg2[%c0_2, %c0_3] : memref<16x128xf32, #tpu.memory_space<vmem>>, vector<16x128xf32>
    %5 = math.log %3 : vector<16x128xf32>
    %cst = arith.constant -1.000000e+02 : f32
    %6 = vector.broadcast %cst : f32 to vector<16x128xf32>
    %7 = arith.maximumf %5, %6 : vector<16x128xf32>
    %cst_4 = arith.constant 1.000000e+00 : f32
    %8 = vector.broadcast %cst_4 : f32 to vector<16x128xf32>
    %9 = arith.subf %8, %3 : vector<16x128xf32>
    %10 = math.log %9 : vector<16x128xf32>
    %cst_5 = arith.constant -1.000000e+02 : f32
    %11 = vector.broadcast %cst_5 : f32 to vector<16x128xf32>
    %12 = arith.maximumf %10, %11 : vector<16x128xf32>
    %13 = arith.mulf %4, %7 : vector<16x128xf32>
    %cst_6 = arith.constant 1.000000e+00 : f32
    %14 = vector.broadcast %cst_6 : f32 to vector<16x128xf32>
    %15 = arith.subf %14, %4 : vector<16x128xf32>
    %16 = arith.mulf %15, %12 : vector<16x128xf32>
    %17 = arith.addf %13, %16 : vector<16x128xf32>
    %cst_7 = arith.constant 0.000000e+00 : f32
    %18 = vector.broadcast %cst_7 : f32 to vector<16x128xf32>
    %19 = arith.subf %18, %17 : vector<16x128xf32>
    %20 = arith.subf %3, %4 : vector<16x128xf32>
    %21 = arith.mulf %20, %20 : vector<16x128xf32>
    %c0_8 = arith.constant 0 : index
    %c0_9 = arith.constant 0 : index
    %22 = vector.load %arg6[%c0_8, %c0_9] : memref<8x128xf32, #tpu.memory_space<vmem>>, vector<8x128xf32>
    %23 = vector.shape_cast %19 : vector<16x128xf32> to vector<2x8x128xf32>
    %cst_10 = arith.constant dense<0.000000e+00> : vector<8x128xf32>
    %24 = vector.multi_reduction <add>, %23, %cst_10 [0] : vector<2x8x128xf32> to vector<8x128xf32>
    %25 = arith.addf %22, %24 : vector<8x128xf32>
    %c0_11 = arith.constant 0 : index
    %c0_12 = arith.constant 0 : index
    %26 = vector.load %arg6[%c0_11, %c0_12] : memref<8x128xf32, #tpu.memory_space<vmem>>, vector<8x128xf32>
    tpu.vector_store %arg6[%c0_11, %c0_12], %25 {strides = array<i32>} : memref<8x128xf32, #tpu.memory_space<vmem>>, vector<8x128xf32>,
    %c0_13 = arith.constant 0 : index
    %c0_14 = arith.constant 0 : index
    %27 = vector.load %arg7[%c0_13, %c0_14] : memref<8x128xf32, #tpu.memory_space<vmem>>, vector<8x128xf32>
    %28 = vector.shape_cast %21 : vector<16x128xf32> to vector<2x8x128xf32>
    %cst_15 = arith.constant dense<0.000000e+00> : vector<8x128xf32>
    %29 = vector.multi_reduction <add>, %28, %cst_15 [0] : vector<2x8x128xf32> to vector<8x128xf32>
    %30 = arith.addf %27, %29 : vector<8x128xf32>
    %c0_16 = arith.constant 0 : index
    %c0_17 = arith.constant 0 : index
    %31 = vector.load %arg7[%c0_16, %c0_17] : memref<8x128xf32, #tpu.memory_space<vmem>>, vector<8x128xf32>
    tpu.vector_store %arg7[%c0_16, %c0_17], %30 {strides = array<i32>} : memref<8x128xf32, #tpu.memory_space<vmem>>, vector<8x128xf32>,
    %c0_i32_18 = arith.constant 0 : i32
    %32 = arith.cmpi eq, %arg0, %c0_i32_18 : i32
    %33 = arith.extui %32 : i1 to i32
    %c0_i32_19 = arith.constant 0 : i32
    %34 = arith.cmpi ne, %33, %c0_i32_19 : i32
    scf.if %34 {
      %c0_20 = arith.constant 0 : index
      %c0_21 = arith.constant 0 : index
      %35 = vector.load %arg6[%c0_20, %c0_21] : memref<8x128xf32, #tpu.memory_space<vmem>>, vector<8x128xf32>
      %36 = vector.shape_cast %35 : vector<8x128xf32> to vector<1x8x128xf32>
      %cst_22 = arith.constant dense<0.000000e+00> : vector<1xf32>
      %37 = vector.multi_reduction <add>, %36, %cst_22 [1, 2] : vector<1x8x128xf32> to vector<1xf32>
      %38 = vector.shape_cast %37 : vector<1xf32> to vector<1x1x1xf32>
      %39 = vector.extract %38[0, 0, 0] : f32 from vector<1x1x1xf32>
      %c0_23 = arith.constant 0 : index
      %c0_24 = arith.constant 0 : index
      %40 = vector.load %arg7[%c0_23, %c0_24] : memref<8x128xf32, #tpu.memory_space<vmem>>, vector<8x128xf32>
      %41 = vector.shape_cast %40 : vector<8x128xf32> to vector<1x8x128xf32>
      %cst_25 = arith.constant dense<0.000000e+00> : vector<1xf32>
      %42 = vector.multi_reduction <add>, %41, %cst_25 [1, 2] : vector<1x8x128xf32> to vector<1xf32>
      %43 = vector.shape_cast %42 : vector<1xf32> to vector<1x1x1xf32>
      %44 = vector.extract %43[0, 0, 0] : f32 from vector<1x1x1xf32>
      %cst_26 = arith.constant 4.8828125E-4 : f32
      %45 = arith.mulf %44, %cst_26 : f32
      %c0_27 = arith.constant 0 : index
      %c0_28 = arith.constant 0 : index
      %46 = vector.load %arg3[%c0_27, %c0_28] : memref<1x64xf32, #tpu.memory_space<vmem>>, vector<1x64xf32>
      %c0_29 = arith.constant 0 : index
      %c0_30 = arith.constant 0 : index
      %47 = vector.load %arg4[%c0_29, %c0_30] : memref<1x64xf32, #tpu.memory_space<vmem>>, vector<1x64xf32>
      %cst_31 = arith.constant 1.000000e+00 : f32
      %48 = vector.broadcast %cst_31 : f32 to vector<1x64xf32>
      %49 = arith.addf %48, %47 : vector<1x64xf32>
      %50 = arith.mulf %46, %46 : vector<1x64xf32>
      %51 = arith.subf %49, %50 : vector<1x64xf32>
      %52 = math.exp %47 : vector<1x64xf32>
      %53 = arith.subf %51, %52 : vector<1x64xf32>
      %54 = vector.shape_cast %53 : vector<1x64xf32> to vector<1x1x64xf32>
      %cst_32 = arith.constant dense<0.000000e+00> : vector<1xf32>
      %55 = vector.multi_reduction <add>, %54, %cst_32 [1, 2] : vector<1x1x64xf32> to vector<1xf32>
      %56 = vector.shape_cast %55 : vector<1xf32> to vector<1x1x1xf32>
      %57 = vector.extract %56[0, 0, 0] : f32 from vector<1x1x1xf32>
      %cst_33 = arith.constant -5.000000e-01 : f32
      %58 = arith.mulf %cst_33, %57 : f32
      %cst_34 = arith.constant 1.000000e+00 : f32
      %59 = arith.mulf %cst_34, %39 : f32
      %cst_35 = arith.constant 1.000000e+00 : f32
      %60 = arith.mulf %cst_35, %45 : f32
      %61 = arith.addf %59, %60 : f32
      %cst_36 = arith.constant 1.000000e+00 : f32
      %62 = arith.mulf %cst_36, %58 : f32
      %63 = arith.addf %61, %62 : f32
      %c0_37 = arith.constant 0 : index
      %c0_38 = arith.constant 0 : index
      %64 = memref.load %arg5[%c0_37, %c0_38] : memref<1x1xf32, #tpu.memory_space<smem>>
      memref.store %63, %arg5[%c0_37, %c0_38] : memref<1x1xf32, #tpu.memory_space<smem>>
    } else {
    }
    return
  }
  func.func @transform_0(%arg0: i32) -> (i32, i32) {
    %c0_i32 = arith.constant 0 : i32
    %c0_i32_0 = arith.constant 0 : i32
    return %arg0, %c0_i32 : i32, i32
  }
  func.func @transform_1(%arg0: i32) -> (i32, i32) {
    %c0_i32 = arith.constant 0 : i32
    %c0_i32_0 = arith.constant 0 : i32
    return %arg0, %c0_i32 : i32, i32
  }
  func.func @transform_2(%arg0: i32) -> (i32, i32) {
    %c0_i32 = arith.constant 0 : i32
    %c0_i32_0 = arith.constant 0 : i32
    %c0_i32_1 = arith.constant 0 : i32
    return %c0_i32, %c0_i32_0 : i32, i32
  }
  func.func @transform_3(%arg0: i32) -> (i32, i32) {
    %c0_i32 = arith.constant 0 : i32
    %c0_i32_0 = arith.constant 0 : i32
    %c0_i32_1 = arith.constant 0 : i32
    return %c0_i32, %c0_i32_0 : i32, i32
  }
  func.func @transform_4(%arg0: i32) -> (i32, i32) {
    %c0_i32 = arith.constant 0 : i32
    %c0_i32_0 = arith.constant 0 : i32
    %c0_i32_1 = arith.constant 0 : i32
    return %c0_i32, %c0_i32_0 : i32, i32
  }
}

</mosaic_0001>

<llo_original>
// kernel: tpu_custom_call.1
$region0: #{tpu_custom_call.1}
  #allocation0 [shape = 'u32[]', space=smem, size = 0x4, offset = 0x4, fixed_abs, tag = 'smem constant byte address 0x4 - core index']
  #allocation1 [shape = 'u32[144,128]{1,0:T(1,128)}', space=vmem, size = 0x12000, scoped, tag = 'internal scratch']
  #allocation2 [shape = 'f32[8,128]{1,0:T(8,128)}', space=vmem, size = 0x1000, scoped, tag = 'scratch operand']
  #allocation3 [shape = 'f32[8,128]{1,0:T(8,128)}', space=vmem, size = 0x1000, scoped, tag = 'scratch operand']
  %s0 = inlined_call_operand.hbm [shape: f32[16,128], index: 0, kind: input, shape index: {}]
  %s1 = inlined_call_operand.hbm [shape: f32[16,128], index: 1, kind: input, shape index: {}]
  %s2 = inlined_call_operand.vmem [shape: f32[1,64], index: 2, kind: input, shape index: {}]
  %s3 = inlined_call_operand.vmem [shape: f32[1,64], index: 3, kind: input, shape index: {}]
  %s4 = inlined_call_operand.hbm [shape: f32[1,1], index: 4, kind: output, shape index: {}]
  %s5 = sld [smem:[#allocation0]]
  $region42: #{tpu_custom_call.1} parent=0
    _
  %s7 = ssub.s32 1, %s5
  %s8 = scalar_select 0, %s7, %s5
  $region1: #{tpu_custom_call.1} parent=0
    #allocation4 [shape = 'u8[8192]{0}', space=vmem, size = 0x2000, scoped, tag = 'input window, operand 0, single buffered']
    #allocation5 [shape = 's32[1]{0}', space=sflag, size = 0x4, scoped, tag = 'scoped memory for tpu_custom_call.1']
    #allocation6 [shape = 's32[1]{0}', space=sflag, size = 0x4, scoped, tag = 'scoped memory for tpu_custom_call.1']
    #allocation7 [shape = 'u8[8192]{0}', space=vmem, size = 0x2000, scoped, tag = 'input window, operand 1, single buffered']
    #allocation8 [shape = 's32[1]{0}', space=sflag, size = 0x4, scoped, tag = 'scoped memory for tpu_custom_call.1']
    #allocation9 [shape = 'u8[512]{0}', space=smem, size = 0x200, scoped, tag = 'output window, operand 0, single buffered']
    %9 = vsyncpa [#allocation5], 0
    %10 = vsyncpa [#allocation8], 0
    %11 = vsyncpa [#allocation6], 0
    // Predicated region
    $region2: #{tpu_custom_call.1} parent=1 // pred_check
      _
    $region3: #{tpu_custom_call.1} parent=1 // pred_check_branch
      %13 = sbr.rel (0) target = $region5
    $region4: #{tpu_custom_call.1} parent=1 // pred_region
      %s15 = ssub.s32 256, 256
      %16 = vsyncadd [#allocation5], %s15
      %s17 = sshll.u32 [#allocation4], 4
      %s18 = int_to_ptr.vmem [resolvable:$true] %s17
      %23 = dma.hbm_to_vmem [thread:$0]  %s0, 256, %s18, [#allocation5], 128, 128, 8
    $region5: #{tpu_custom_call.1} parent=1 // pred_fallthru
      _
    // Predicated region
    $region6: #{tpu_custom_call.1} parent=1 // pred_check
      _
    $region7: #{tpu_custom_call.1} parent=1 // pred_check_branch
      %25 = sbr.rel (0) target = $region9
    $region8: #{tpu_custom_call.1} parent=1 // pred_region
      %s27 = ssub.s32 256, 256
      %28 = vsyncadd [#allocation8], %s27
      %s29 = sshll.u32 [#allocation7], 4
      %s30 = int_to_ptr.vmem [resolvable:$true] %s29
      %35 = dma.hbm_to_vmem [thread:$0]  %s1, 256, %s30, [#allocation8], 128, 128, 8
    $region9: #{tpu_custom_call.1} parent=1 // pred_fallthru
      _
    // Predicated region
    $region10: #{tpu_custom_call.1} parent=1 // pred_check
      _
    $region11: #{tpu_custom_call.1} parent=1 // pred_check_branch
      %37 = sbr.rel (0) target = $region13
    $region12: #{tpu_custom_call.1} parent=1 // pred_region
      _
    $region13: #{tpu_custom_call.1} parent=1 // pred_fallthru
      _
    // Predicated region
    $region14: #{tpu_custom_call.1} parent=1 // pred_check
      _
    $region15: #{tpu_custom_call.1} parent=1 // pred_check_branch
      %39 = sbr.rel (0) target = $region17
    $region16: #{tpu_custom_call.1} parent=1 // pred_region
      _
    $region17: #{tpu_custom_call.1} parent=1 // pred_fallthru
      _
    // Predicated region
    $region18: #{tpu_custom_call.1} parent=1 // pred_check
      _
    $region19: #{tpu_custom_call.1} parent=1 // pred_check_branch
      %41 = sbr.rel (0) target = $region21
    $region20: #{tpu_custom_call.1} parent=1 // pred_region
      %42 = dma.done [#allocation5], 256
    $region21: #{tpu_custom_call.1} parent=1 // pred_fallthru
      _
    // Predicated region
    $region22: #{tpu_custom_call.1} parent=1 // pred_check
      _
    $region23: #{tpu_custom_call.1} parent=1 // pred_check_branch
      %44 = sbr.rel (0) target = $region25
    $region24: #{tpu_custom_call.1} parent=1 // pred_region
      %45 = dma.done [#allocation8], 256
    $region25: #{tpu_custom_call.1} parent=1 // pred_fallthru
      _
    %p46 = scmp.eq.s32.totalorder 0, 0
    // Predicated region
    $region26: #{tpu_custom_call.1} parent=1 // pred_check
      %p47 = pneg %p46
    $region27: #{tpu_custom_call.1} parent=1 // pred_check_branch
      %49 = sbr.rel (%p47) target = $region29
    $region28: #{tpu_custom_call.1} parent=1 // pred_region
      %50 = vst [vmem:[#allocation2] sm:$0xff] 0.0
      %51 = vst [vmem:[#allocation3] sm:$0xff] 0.0
    $region29: #{tpu_custom_call.1} parent=1 // pred_fallthru
      _
    %v52 = vld [vmem:[#allocation4] sm:$0xff]
    %v53 = vld [vmem:[#allocation4 + $0x8] sm:$0xff]
    %v54 = vld [vmem:[#allocation7] sm:$0xff]
    %v55 = vld [vmem:[#allocation7 + $0x8] sm:$0xff]
    %v56 = vlog2.pop %v52
    %v57 = vmul.f32 %v56, 0.6931472
    %v58 = vlog2.pop %v53
    %v59 = vmul.f32 %v58, 0.6931472
    %v60 = vmax.f32 %v57, -100.0
    %v61 = vmax.f32 %v59, -100.0
    %v62 = vsub.f32 1.0, %v52
    %v63 = vsub.f32 1.0, %v53
    %v64 = vlog2.pop %v62
    %v65 = vmul.f32 %v64, 0.6931472
    %v66 = vlog2.pop %v63
    %v67 = vmul.f32 %v66, 0.6931472
    %v68 = vmax.f32 %v65, -100.0
    %v69 = vmax.f32 %v67, -100.0
    %v70 = vmul.f32 %v54, %v60
    %v71 = vmul.f32 %v55, %v61
    %v72 = vsub.f32 1.0, %v54
    %v73 = vsub.f32 1.0, %v55
    %v74 = vmul.f32 %v72, %v68
    %v75 = vmul.f32 %v73, %v69
    %v76 = vadd.f32 %v70, %v74
    %v77 = vadd.f32 %v71, %v75
    %v78 = vsub.f32 0.0, %v76
    %v79 = vsub.f32 0.0, %v77
    %v80 = vsub.f32 %v52, %v54
    %v81 = vsub.f32 %v53, %v55
    %v82 = vmul.f32 %v80, %v80
    %v83 = vmul.f32 %v81, %v81
    %v84 = vld [vmem:[#allocation2] sm:$0xff]
    %v85 = vadd.f32 %v78, %v79
    %v86 = vadd.f32 %v84, %v85
    %87 = vst [vmem:[#allocation2] sm:$0xff] %v86
    %v88 = vld [vmem:[#allocation3] sm:$0xff]
    %v89 = vadd.f32 %v82, %v83
    %v90 = vadd.f32 %v88, %v89
    %91 = vst [vmem:[#allocation3] sm:$0xff] %v90
    // Predicated region
    $region30: #{tpu_custom_call.1} parent=1 // pred_check
      %p92 = pneg %p46
    $region31: #{tpu_custom_call.1} parent=1 // pred_check_branch
      %94 = sbr.rel (%p92) target = $region33
    $region32: #{tpu_custom_call.1} parent=1 // pred_region
      %v95 = vld [vmem:[#allocation2] sm:$0xff]
      %96 = vadd.xlane.f32.xlu0 %v95
      %v97 = vpop.xlane.xlu0 %96
      %v98 = vrot.slane %v97, 4
      %v99 = vadd.f32 %v97, %v98
      %v100 = vrot.slane %v99, 2
      %v101 = vadd.f32 %v99, %v100
      %v102 = vrot.slane %v101, 1
      %v103 = vadd.f32 %v101, %v102
      %s104 = vtos %v103
      %v105 = vld [vmem:[#allocation3] sm:$0xff]
      %106 = vadd.xlane.f32.xlu0 %v105
      %v107 = vpop.xlane.xlu0 %106
      %v108 = vrot.slane %v107, 4
      %v109 = vadd.f32 %v107, %v108
      %v110 = vrot.slane %v109, 2
      %v111 = vadd.f32 %v109, %v110
      %v112 = vrot.slane %v111, 1
      %v113 = vadd.f32 %v111, %v112
      %s114 = vtos %v113
      %s115 = smul.f32 %s114, 0.00048828125
      %v116 = vld [vmem:[%s2] sm:$0x1]
      %v117 = vld [vmem:[%s3] sm:$0x1]
      %v118 = vadd.f32 %v117, 1.0
      %v119 = vmul.f32 %v116, %v116
      %v120 = vsub.f32 %v118, %v119
      %v121 = vmul.f32 %v117, 1.442695
      %v122 = vpow.pop %v121
      %v123 = vsub.f32 %v120, %v122
      %vm124 = vcmask 516096
      %v125 = vsel %vm124, %v123, 0.0
      %126 = vadd.xlane.f32.xlu0 %v125
      %v127 = vpop.xlane.xlu0 %126
      %v128 = vrot.slane %v127, 4
      %v129 = vadd.f32 %v127, %v128
      %v130 = vrot.slane %v129, 2
      %v131 = vadd.f32 %v129, %v130
      %v132 = vrot.slane %v131, 1
      %v133 = vadd.f32 %v131, %v132
      %s134 = vtos %v133
      %s135 = smul.f32 %s134, -0.5
      %s136 = sadd.f32 %s104, %s115
      %s137 = sadd.f32 %s136, %s135
      %s138 = scalar_lea.smem [#allocation9], 0
      %139 = sst [smem:[%s138]] %s137
    $region33: #{tpu_custom_call.1} parent=1 // pred_fallthru
      _
    // Predicated region
    $region34: #{tpu_custom_call.1} parent=1 // pred_check
      _
    $region35: #{tpu_custom_call.1} parent=1 // pred_check_branch
      %141 = sbr.rel (0) target = $region37
    $region36: #{tpu_custom_call.1} parent=1 // pred_region
      %s143 = ssub.s32 16, 16
      %144 = vsyncadd [#allocation6], %s143
      %147 = dma.smem_to_hbm [#allocation9], 16, %s4, [#allocation6]
    $region37: #{tpu_custom_call.1} parent=1 // pred_fallthru
      _
    // Predicated region
    $region38: #{tpu_custom_call.1} parent=1 // pred_check
      _
    $region39: #{tpu_custom_call.1} parent=1 // pred_check_branch
      %149 = sbr.rel (0) target = $region41
    $region40: #{tpu_custom_call.1} parent=1 // pred_region
      %150 = dma.done [#allocation6], 16
    $region41: #{tpu_custom_call.1} parent=1 // pred_fallthru
      _
    %151 = sfence
    %152 = vsyncpa [#allocation5], 1
    %153 = vsyncpa [#allocation8], 1
    %154 = vsyncpa [#allocation6], 1

</llo_original>
